<compile_context>
chip_gen: v7x
topology: tpu7x:2x2x1
jax: 0.10.0
libtpu: 0.0.40
codegen_flags: <defaults>
</compile_context>

<pallas_src>
import jax
import jax.numpy as jnp
from jax.experimental import pallas as pl
from jax.experimental.pallas import tpu as pltpu

LN_EPS = 1e-5  # torch.nn.LayerNorm default

_MAX_BLOCK_PATCHES = 1024       # lane-axis tile (multiple of 128)
_MAX_BLOCK_BATCH = 8            # unroll bound for the per-batch loop
_TARGET_BLOCK_BYTES = 1 << 20   # aim ~1 MiB of input per grid step


def _norm_kernel(x_ref, gamma_ref, beta_ref, o_ref):
    # x_ref:     (bB, C, tL)  source layout: C on sublanes, patches on lanes
    # gamma_ref: (C, 1)
    # beta_ref:  (C, 1)
    # o_ref:     (bB, tL, C)
    g = gamma_ref[...].astype(jnp.float32)                  # (C, 1)
    b = beta_ref[...].astype(jnp.float32)                   # (C, 1)
    for i in range(x_ref.shape[0]):                         # static, bB <= 8
        x = x_ref[i].astype(jnp.float32)                    # (C, tL)
        mean = jnp.mean(x, axis=0, keepdims=True)           # (1, tL) sublane reduce
        centered = x - mean
        var = jnp.mean(centered * centered, axis=0, keepdims=True)
        y = centered * jax.lax.rsqrt(var + LN_EPS) * g + b  # still (C, tL)
        # Single transpose, right before the store.
        o_ref[i] = jnp.transpose(y, (1, 0)).astype(o_ref.dtype)


def patch_embed_forward(x, gamma=None, beta=None, *, use_norm=True,
                        block_patches=None, block_batch=None):
    """PatchEmbed.forward: (B, C, L) -> (B, L, C), optional LayerNorm over C."""
    B, C, L = x.shape

    if not use_norm:
        # norm_layer=None: pure transpose -> one full-bandwidth XLA copy.
        return jnp.swapaxes(x, 1, 2)

    # Lane-axis tile: full L when small, else a multiple of 128.
    if block_patches is None:
        block_patches = L if L <= _MAX_BLOCK_PATCHES else _MAX_BLOCK_PATCHES
    tL = int(block_patches)
    if tL != L and tL % 128 != 0:
        raise ValueError("block_patches must equal L or be a multiple of 128")

    # Fold batch elements into one block until ~_TARGET_BLOCK_BYTES of input.
    if block_batch is None:
        per_batch = C * tL * x.dtype.itemsize
        block_batch = max(1, min(B, _MAX_BLOCK_BATCH,
                                 _TARGET_BLOCK_BYTES // max(per_batch, 1)))
    bB = int(block_batch)

    grid = (pl.cdiv(B, bB), pl.cdiv(L, tL))

    gamma2d = gamma.reshape(C, 1)
    beta2d = beta.reshape(C, 1)

    return pl.pallas_call(
        _norm_kernel,
        out_shape=jax.ShapeDtypeStruct((B, L, C), x.dtype),
        grid_spec=pltpu.PrefetchScalarGridSpec(
            num_scalar_prefetch=0,
            grid=grid,
            in_specs=[
                pl.BlockSpec((bB, C, tL), lambda ib, il: (ib, 0, il)),
                pl.BlockSpec((C, 1), lambda ib, il: (0, 0)),
                pl.BlockSpec((C, 1), lambda ib, il: (0, 0)),
            ],
            out_specs=pl.BlockSpec((bB, tL, C), lambda ib, il: (ib, il, 0)),
        ),
        compiler_params=pltpu.CompilerParams(
            dimension_semantics=("parallel", "parallel"),
            vmem_limit_bytes=48 * 1024 * 1024,
        ),
    )(x, gamma2d, beta2d)


def patch_embed_reference(x, gamma, beta, *, use_norm=True):
    xt = jnp.transpose(x, (0, 2, 1))
    if not use_norm:
        return xt
    xt = xt.astype(jnp.float32)
    mean = jnp.mean(xt, axis=-1, keepdims=True)
    var = jnp.mean((xt - mean) ** 2, axis=-1, keepdims=True)
    out = (xt - mean) / jnp.sqrt(var + LN_EPS) * gamma + beta
    return out.astype(x.dtype)


if __name__ == "__main__":
    key = jax.random.PRNGKey(0)
    kx, kg, kb, kx2, kg2, kb2 = jax.random.split(key, 6)

    # --- Small shape consistent with the module: B=2, embed_dim=32, patches=8.
    B, C, L = 2, 32, 8
    x = jax.random.normal(kx, (B, C, L), dtype=jnp.float32)
    gamma = 1.0 + 0.1 * jax.random.normal(kg, (C,), dtype=jnp.float32)
    beta = 0.1 * jax.random.normal(kb, (C,), dtype=jnp.float32)

    out = jax.block_until_ready(patch_embed_forward(x, gamma, beta, use_norm=True))
    ref = patch_embed_reference(x, gamma, beta, use_norm=True)
    assert out.shape == (B, L, C), out.shape
    assert jnp.allclose(out, ref, atol=1e-4, rtol=1e-5), "mismatch vs reference (small)"

    # norm_layer=None path (pure transpose, no Pallas).
    out_nonorm = jax.block_until_ready(
        patch_embed_forward(x, gamma, beta, use_norm=False))
    assert jnp.allclose(out_nonorm, jnp.transpose(x, (0, 2, 1)))

    # --- Tiled path: SwinIR-like embed_dim=96, L not a multiple of the tile,
    # forced 128-wide lane tiles so the multi-step / padded-edge path runs.
    B2, C2, L2 = 3, 96, 200
    x2 = jax.random.normal(kx2, (B2, C2, L2), dtype=jnp.float32)
    gamma2 = 1.0 + 0.1 * jax.random.normal(kg2, (C2,), dtype=jnp.float32)
    beta2 = 0.1 * jax.random.normal(kb2, (C2,), dtype=jnp.float32)
    out2 = jax.block_until_ready(
        patch_embed_forward(x2, gamma2, beta2, use_norm=True, block_patches=128))
    ref2 = patch_embed_reference(x2, gamma2, beta2, use_norm=True)
    assert out2.shape == (B2, L2, C2), out2.shape
    assert jnp.allclose(out2, ref2, atol=1e-4, rtol=1e-5), "mismatch vs reference (tiled)"

    print("KERNEL_OK")
</pallas_src>

<mosaic_0001>
module attributes {stable_mosaic.version = 11 : i64} {
  func.func @_norm_kernel(%arg0: i32, %arg1: i32, %arg2: memref<2x32x8xf32, #tpu.memory_space<vmem>>, %arg3: memref<32x1xf32, #tpu.memory_space<vmem>>, %arg4: memref<32x1xf32, #tpu.memory_space<vmem>>, %arg5: memref<2x8x32xf32, #tpu.memory_space<vmem>>) attributes {dimension_semantics = [#tpu.dimension_semantics<parallel>, #tpu.dimension_semantics<parallel>], iteration_bounds = array<i64: 1, 1>, scalar_prefetch = 0 : i64, scratch_operands = 0 : i64, tpu.core_type = #tpu.core_type<tc>, window_params = [{transform_indices = @transform_0, window_bounds = array<i64: 2, 32, 8>}, {pipeline_mode = #tpu.pipeline_mode<synchronous>, transform_indices = @transform_1, window_bounds = array<i64: 32, 1>}, {pipeline_mode = #tpu.pipeline_mode<synchronous>, transform_indices = @transform_2, window_bounds = array<i64: 32, 1>}, {transform_indices = @transform_3, window_bounds = array<i64: 2, 8, 32>}]} {
    %c0 = arith.constant 0 : index
    %c0_0 = arith.constant 0 : index
    %0 = vector.load %arg3[%c0, %c0_0] : memref<32x1xf32, #tpu.memory_space<vmem>>, vector<32x1xf32>
    %c0_1 = arith.constant 0 : index
    %c0_2 = arith.constant 0 : index
    %1 = vector.load %arg4[%c0_1, %c0_2] : memref<32x1xf32, #tpu.memory_space<vmem>>, vector<32x1xf32>
    %c0_3 = arith.constant 0 : index
    %c0_4 = arith.constant 0 : index
    %c0_5 = arith.constant 0 : index
    %2 = vector.load %arg2[%c0_3, %c0_4, %c0_5] : memref<2x32x8xf32, #tpu.memory_space<vmem>>, vector<1x32x8xf32>
    %3 = vector.shape_cast %2 : vector<1x32x8xf32> to vector<32x8xf32>
    %cst = arith.constant dense<0.000000e+00> : vector<8xf32>
    %4 = vector.multi_reduction <add>, %3, %cst [0] : vector<32x8xf32> to vector<8xf32>
    %5 = vector.shape_cast %4 : vector<8xf32> to vector<1x8xf32>
    %cst_6 = arith.constant 3.200000e+01 : f32
    %6 = vector.broadcast %cst_6 : f32 to vector<1x8xf32>
    %7 = arith.divf %5, %6 : vector<1x8xf32>
    %8 = vector.broadcast %7 : vector<1x8xf32> to vector<32x8xf32>
    %9 = arith.subf %3, %8 : vector<32x8xf32>
    %10 = arith.mulf %9, %9 : vector<32x8xf32>
    %cst_7 = arith.constant dense<0.000000e+00> : vector<8xf32>
    %11 = vector.multi_reduction <add>, %10, %cst_7 [0] : vector<32x8xf32> to vector<8xf32>
    %12 = vector.shape_cast %11 : vector<8xf32> to vector<1x8xf32>
    %cst_8 = arith.constant 3.200000e+01 : f32
    %13 = vector.broadcast %cst_8 : f32 to vector<1x8xf32>
    %14 = arith.divf %12, %13 : vector<1x8xf32>
    %cst_9 = arith.constant 9.99999974E-6 : f32
    %15 = vector.broadcast %cst_9 : f32 to vector<1x8xf32>
    %16 = arith.addf %14, %15 : vector<1x8xf32>
    %17 = math.rsqrt %16 : vector<1x8xf32>
    %18 = vector.broadcast %17 : vector<1x8xf32> to vector<32x8xf32>
    %19 = arith.mulf %9, %18 : vector<32x8xf32>
    %20 = vector.broadcast %0 : vector<32x1xf32> to vector<32x8xf32>
    %21 = arith.mulf %19, %20 : vector<32x8xf32>
    %22 = vector.broadcast %1 : vector<32x1xf32> to vector<32x8xf32>
    %23 = arith.addf %21, %22 : vector<32x8xf32>
    %24 = tpu.transpose %23, [1, 0] : vector<32x8xf32> -> vector<8x32xf32>
    %c0_10 = arith.constant 0 : index
    %c0_11 = arith.constant 0 : index
    %c0_12 = arith.constant 0 : index
    %25 = vector.load %arg5[%c0_10, %c0_11, %c0_12] : memref<2x8x32xf32, #tpu.memory_space<vmem>>, vector<1x8x32xf32>
    %26 = vector.shape_cast %25 : vector<1x8x32xf32> to vector<8x32xf32>
    %27 = vector.shape_cast %24 : vector<8x32xf32> to vector<1x8x32xf32>
    tpu.vector_store %arg5[%c0_10, %c0_11, %c0_12], %27 {strides = array<i32>} : memref<2x8x32xf32, #tpu.memory_space<vmem>>, vector<1x8x32xf32>,
    %c1 = arith.constant 1 : index
    %c0_13 = arith.constant 0 : index
    %c0_14 = arith.constant 0 : index
    %28 = vector.load %arg2[%c1, %c0_13, %c0_14] : memref<2x32x8xf32, #tpu.memory_space<vmem>>, vector<1x32x8xf32>
    %29 = vector.shape_cast %28 : vector<1x32x8xf32> to vector<32x8xf32>
    %cst_15 = arith.constant dense<0.000000e+00> : vector<8xf32>
    %30 = vector.multi_reduction <add>, %29, %cst_15 [0] : vector<32x8xf32> to vector<8xf32>
    %31 = vector.shape_cast %30 : vector<8xf32> to vector<1x8xf32>
    %cst_16 = arith.constant 3.200000e+01 : f32
    %32 = vector.broadcast %cst_16 : f32 to vector<1x8xf32>
    %33 = arith.divf %31, %32 : vector<1x8xf32>
    %34 = vector.broadcast %33 : vector<1x8xf32> to vector<32x8xf32>
    %35 = arith.subf %29, %34 : vector<32x8xf32>
    %36 = arith.mulf %35, %35 : vector<32x8xf32>
    %cst_17 = arith.constant dense<0.000000e+00> : vector<8xf32>
    %37 = vector.multi_reduction <add>, %36, %cst_17 [0] : vector<32x8xf32> to vector<8xf32>
    %38 = vector.shape_cast %37 : vector<8xf32> to vector<1x8xf32>
    %cst_18 = arith.constant 3.200000e+01 : f32
    %39 = vector.broadcast %cst_18 : f32 to vector<1x8xf32>
    %40 = arith.divf %38, %39 : vector<1x8xf32>
    %cst_19 = arith.constant 9.99999974E-6 : f32
    %41 = vector.broadcast %cst_19 : f32 to vector<1x8xf32>
    %42 = arith.addf %40, %41 : vector<1x8xf32>
    %43 = math.rsqrt %42 : vector<1x8xf32>
    %44 = vector.broadcast %43 : vector<1x8xf32> to vector<32x8xf32>
    %45 = arith.mulf %35, %44 : vector<32x8xf32>
    %46 = vector.broadcast %0 : vector<32x1xf32> to vector<32x8xf32>
    %47 = arith.mulf %45, %46 : vector<32x8xf32>
    %48 = vector.broadcast %1 : vector<32x1xf32> to vector<32x8xf32>
    %49 = arith.addf %47, %48 : vector<32x8xf32>
    %50 = tpu.transpose %49, [1, 0] : vector<32x8xf32> -> vector<8x32xf32>
    %c1_20 = arith.constant 1 : index
    %c0_21 = arith.constant 0 : index
    %c0_22 = arith.constant 0 : index
    %51 = vector.load %arg5[%c1_20, %c0_21, %c0_22] : memref<2x8x32xf32, #tpu.memory_space<vmem>>, vector<1x8x32xf32>
    %52 = vector.shape_cast %51 : vector<1x8x32xf32> to vector<8x32xf32>
    %53 = vector.shape_cast %50 : vector<8x32xf32> to vector<1x8x32xf32>
    tpu.vector_store %arg5[%c1_20, %c0_21, %c0_22], %53 {strides = array<i32>} : memref<2x8x32xf32, #tpu.memory_space<vmem>>, vector<1x8x32xf32>,
    return
  }
  func.func @transform_0(%arg0: i32, %arg1: i32) -> (i32, i32, i32) {
    %c0_i32 = arith.constant 0 : i32
    %c0_i32_0 = arith.constant 0 : i32
    return %arg0, %c0_i32, %arg1 : i32, i32, i32
  }
  func.func @transform_1(%arg0: i32, %arg1: i32) -> (i32, i32) {
    %c0_i32 = arith.constant 0 : i32
    %c0_i32_0 = arith.constant 0 : i32
    %c0_i32_1 = arith.constant 0 : i32
    return %c0_i32, %c0_i32_0 : i32, i32
  }
  func.func @transform_2(%arg0: i32, %arg1: i32) -> (i32, i32) {
    %c0_i32 = arith.constant 0 : i32
    %c0_i32_0 = arith.constant 0 : i32
    %c0_i32_1 = arith.constant 0 : i32
    return %c0_i32, %c0_i32_0 : i32, i32
  }
  func.func @transform_3(%arg0: i32, %arg1: i32) -> (i32, i32, i32) {
    %c0_i32 = arith.constant 0 : i32
    %c0_i32_0 = arith.constant 0 : i32
    return %arg0, %arg1, %c0_i32 : i32, i32, i32
  }
}

</mosaic_0001>

<llo_original>
// kernel: tpu_custom_call.1
$region0: #{tpu_custom_call.1}
  #allocation0 [shape = 'u32[]', space=smem, size = 0x4, offset = 0x4, fixed_abs, tag = 'smem constant byte address 0x4 - core index']
  #allocation1 [shape = 'u32[144,128]{1,0:T(1,128)}', space=vmem, size = 0x12000, scoped, tag = 'internal scratch']
  %s0 = inlined_call_operand.vmem [shape: f32[2,32,8], index: 0, kind: input, shape index: {}]
  %s1 = inlined_call_operand.vmem [shape: f32[32,1], index: 1, kind: input, shape index: {}]
  %s2 = inlined_call_operand.vmem [shape: f32[32,1], index: 2, kind: input, shape index: {}]
  %s3 = inlined_call_operand.hbm [shape: f32[2,8,32], index: 3, kind: output, shape index: {}]
  %s4 = sld [smem:[#allocation0]]
  $region22: #{tpu_custom_call.1} parent=0
    _
  %s6 = ssub.s32 1, %s4
  %s7 = scalar_select 0, %s6, %s4
  $region1: #{tpu_custom_call.1} parent=0
    #allocation2 [shape = 'u8[8192]{0}', space=vmem, size = 0x2000, scoped, tag = 'output window, operand 0, single buffered']
    #allocation3 [shape = 's32[1]{0}', space=sflag, size = 0x4, scoped, tag = 'scoped memory for tpu_custom_call.1']
    %8 = vsyncpa [#allocation3], 0
    // Predicated region
    $region2: #{tpu_custom_call.1} parent=1 // pred_check
      _
    $region3: #{tpu_custom_call.1} parent=1 // pred_check_branch
      %10 = sbr.rel (0) target = $region5
    $region4: #{tpu_custom_call.1} parent=1 // pred_region
      _
    $region5: #{tpu_custom_call.1} parent=1 // pred_fallthru
      _
    // Predicated region
    $region6: #{tpu_custom_call.1} parent=1 // pred_check
      _
    $region7: #{tpu_custom_call.1} parent=1 // pred_check_branch
      %12 = sbr.rel (0) target = $region9
    $region8: #{tpu_custom_call.1} parent=1 // pred_region
      _
    $region9: #{tpu_custom_call.1} parent=1 // pred_fallthru
      _
    // Predicated region
    $region10: #{tpu_custom_call.1} parent=1 // pred_check
      _
    $region11: #{tpu_custom_call.1} parent=1 // pred_check_branch
      %14 = sbr.rel (0) target = $region13
    $region12: #{tpu_custom_call.1} parent=1 // pred_region
      _
    $region13: #{tpu_custom_call.1} parent=1 // pred_fallthru
      _
    %v15 = vld [vmem:[%s1] sm:$0xff]
    %v16 = vld [vmem:[%s1 + $0x8] sm:$0xff]
    %v17 = vld [vmem:[%s1 + $0x10] sm:$0xff]
    %v18 = vld [vmem:[%s1 + $0x18] sm:$0xff]
    %v19 = vld [vmem:[%s2] sm:$0xff]
    %v20 = vld [vmem:[%s2 + $0x8] sm:$0xff]
    %v21 = vld [vmem:[%s2 + $0x10] sm:$0xff]
    %v22 = vld [vmem:[%s2 + $0x18] sm:$0xff]
    %v23 = vld [vmem:[%s0] sm:$0xff]
    %v24 = vld [vmem:[%s0 + $0x8] sm:$0xff]
    %v25 = vld [vmem:[%s0 + $0x10] sm:$0xff]
    %v26 = vld [vmem:[%s0 + $0x18] sm:$0xff]
    %vm27 = vcmask 64512
    %v28 = vsel %vm27, %v23, 0.0
    %v29 = vsel %vm27, %v24, 0.0
    %v30 = vadd.f32 %v28, %v29
    %v31 = vsel %vm27, %v25, 0.0
    %v32 = vadd.f32 %v30, %v31
    %v33 = vsel %vm27, %v26, 0.0
    %v34 = vadd.f32 %v32, %v33
    %v35 = vrot.slane %v34, 4
    %v36 = vadd.f32 %v34, %v35
    %v37 = vrot.slane %v36, 2
    %v38 = vadd.f32 %v36, %v37
    %v39 = vrot.slane %v38, 1
    %v40 = vadd.f32 %v38, %v39
    %v41 = vrcp.pop 32.0
    %v42 = vmul.f32 %v40, %v41
    %v43 = vsub.f32 %v23, %v42
    %v44 = vsub.f32 %v24, %v42
    %v45 = vsub.f32 %v25, %v42
    %v46 = vsub.f32 %v26, %v42
    %v47 = vmul.f32 %v43, %v43
    %v48 = vmul.f32 %v44, %v44
    %v49 = vmul.f32 %v45, %v45
    %v50 = vmul.f32 %v46, %v46
    %v51 = vsel %vm27, %v47, 0.0
    %v52 = vsel %vm27, %v48, 0.0
    %v53 = vadd.f32 %v51, %v52
    %v54 = vsel %vm27, %v49, 0.0
    %v55 = vadd.f32 %v53, %v54
    %v56 = vsel %vm27, %v50, 0.0
    %v57 = vadd.f32 %v55, %v56
    %v58 = vrot.slane %v57, 4
    %v59 = vadd.f32 %v57, %v58
    %v60 = vrot.slane %v59, 2
    %v61 = vadd.f32 %v59, %v60
    %v62 = vrot.slane %v61, 1
    %v63 = vadd.f32 %v61, %v62
    %v64 = vmul.f32 %v63, %v41
    %v65 = vadd.f32 %v64, 1e-05
    %v66 = vrsqrt.pop %v65
    %v67 = vmul.f32 %v43, %v66
    %v68 = vmul.f32 %v44, %v66
    %v69 = vmul.f32 %v45, %v66
    %v70 = vmul.f32 %v46, %v66
    %72 = vset.pattern.permute.xlu0 0
    %73 = vperm.xlu0 %72, %v15
    %v74 = vpop.permute.xlu0 %73
    %77 = vset.pattern.permute.xlu0 0
    %78 = vperm.xlu0 %77, %v16
    %v79 = vpop.permute.xlu0 %78
    %82 = vset.pattern.permute.xlu0 0
    %83 = vperm.xlu0 %82, %v17
    %v84 = vpop.permute.xlu0 %83
    %87 = vset.pattern.permute.xlu0 0
    %88 = vperm.xlu0 %87, %v18
    %v89 = vpop.permute.xlu0 %88
    %v91 = vmul.f32 %v67, %v74
    %v92 = vmul.f32 %v68, %v79
    %v93 = vmul.f32 %v69, %v84
    %v94 = vmul.f32 %v70, %v89
    %96 = vset.pattern.permute.xlu0 0
    %97 = vperm.xlu0 %96, %v19
    %v98 = vpop.permute.xlu0 %97
    %101 = vset.pattern.permute.xlu0 0
    %102 = vperm.xlu0 %101, %v20
    %v103 = vpop.permute.xlu0 %102
    %106 = vset.pattern.permute.xlu0 0
    %107 = vperm.xlu0 %106, %v21
    %v108 = vpop.permute.xlu0 %107
    %111 = vset.pattern.permute.xlu0 0
    %112 = vperm.xlu0 %111, %v22
    %v113 = vpop.permute.xlu0 %112
    %v115 = vadd.f32 %v91, %v98
    %v116 = vadd.f32 %v92, %v103
    %v117 = vadd.f32 %v93, %v108
    %v118 = vadd.f32 %v94, %v113
    %119 = vxpose.xlu0.b32.start [1/16] %v115, 128
    %120 = vxpose.xlu0.b32.cont [2/16] %v116, 128
    %121 = vxpose.xlu0.b32.cont [3/16] %v117, 128
    %122 = vxpose.xlu0.b32.cont [4/16] %v118, 128
    %123 = vxpose.xlu0.b32.cont [5/16] 0.0, 128
    %124 = vxpose.xlu0.b32.cont [6/16] 0.0, 128
    %125 = vxpose.xlu0.b32.cont [7/16] 0.0, 128
    %126 = vxpose.xlu0.b32.cont [8/16] 0.0, 128
    %127 = vxpose.xlu0.b32.cont [9/16] 0.0, 128
    %128 = vxpose.xlu0.b32.cont [10/16] 0.0, 128
    %129 = vxpose.xlu0.b32.cont [11/16] 0.0, 128
    %130 = vxpose.xlu0.b32.cont [12/16] 0.0, 128
    %131 = vxpose.xlu0.b32.cont [13/16] 0.0, 128
    %132 = vxpose.xlu0.b32.cont [14/16] 0.0, 128
    %133 = vxpose.xlu0.b32.cont [15/16] 0.0, 128
    %134 = vxpose.xlu0.b32.end [16/16] 0.0, 128
    %v135 = vpop.trf.xlu0
    %v136 = vpop.trf.xlu0
    %v137 = vpop.trf.xlu0
    %v138 = vpop.trf.xlu0
    %v139 = vpop.trf.xlu0
    %v140 = vpop.trf.xlu0
    %v141 = vpop.trf.xlu0
    %v142 = vpop.trf.xlu0
    %v143 = vpop.trf.xlu0
    %v144 = vpop.trf.xlu0
    %v145 = vpop.trf.xlu0
    %v146 = vpop.trf.xlu0
    %v147 = vpop.trf.xlu0
    %v148 = vpop.trf.xlu0
    %v149 = vpop.trf.xlu0
    %v150 = vpop.trf.xlu0
    %vm151 = vcmask 261120
    %152 = vst.msk [vmem:[#allocation2] sm:$0xff] %vm151, %v135
    %s153 = scalar_lea.vmem %s0, 32
    %v154 = vld [vmem:[%s153] sm:$0xff]
    %v155 = vld [vmem:[%s153 + $0x8] sm:$0xff]
    %v156 = vld [vmem:[%s153 + $0x10] sm:$0xff]
    %v157 = vld [vmem:[%s153 + $0x18] sm:$0xff]
    %v158 = vsel %vm27, %v154, 0.0
    %v159 = vsel %vm27, %v155, 0.0
    %v160 = vadd.f32 %v158, %v159
    %v161 = vsel %vm27, %v156, 0.0
    %v162 = vadd.f32 %v160, %v161
    %v163 = vsel %vm27, %v157, 0.0
    %v164 = vadd.f32 %v162, %v163
    %v165 = vrot.slane %v164, 4
    %v166 = vadd.f32 %v164, %v165
    %v167 = vrot.slane %v166, 2
    %v168 = vadd.f32 %v166, %v167
    %v169 = vrot.slane %v168, 1
    %v170 = vadd.f32 %v168, %v169
    %v171 = vmul.f32 %v170, %v41
    %v172 = vsub.f32 %v154, %v171
    %v173 = vsub.f32 %v155, %v171
    %v174 = vsub.f32 %v156, %v171
    %v175 = vsub.f32 %v157, %v171
    %v176 = vmul.f32 %v172, %v172
    %v177 = vmul.f32 %v173, %v173
    %v178 = vmul.f32 %v174, %v174
    %v179 = vmul.f32 %v175, %v175
    %v180 = vsel %vm27, %v176, 0.0
    %v181 = vsel %vm27, %v177, 0.0
    %v182 = vadd.f32 %v180, %v181
    %v183 = vsel %vm27, %v178, 0.0
    %v184 = vadd.f32 %v182, %v183
    %v185 = vsel %vm27, %v179, 0.0
    %v186 = vadd.f32 %v184, %v185
    %v187 = vrot.slane %v186, 4
    %v188 = vadd.f32 %v186, %v187
    %v189 = vrot.slane %v188, 2
    %v190 = vadd.f32 %v188, %v189
    %v191 = vrot.slane %v190, 1
    %v192 = vadd.f32 %v190, %v191
    %v193 = vmul.f32 %v192, %v41
    %v194 = vadd.f32 %v193, 1e-05
    %v195 = vrsqrt.pop %v194
    %v196 = vmul.f32 %v172, %v195
    %v197 = vmul.f32 %v173, %v195
    %v198 = vmul.f32 %v174, %v195
    %v199 = vmul.f32 %v175, %v195
    %v200 = vmul.f32 %v196, %v74
    %v201 = vmul.f32 %v197, %v79
    %v202 = vmul.f32 %v198, %v84
    %v203 = vmul.f32 %v199, %v89
    %v204 = vadd.f32 %v200, %v98
    %v205 = vadd.f32 %v201, %v103
    %v206 = vadd.f32 %v202, %v108
    %v207 = vadd.f32 %v203, %v113
    %208 = vxpose.xlu0.b32.start [1/16] %v204, 128
    %209 = vxpose.xlu0.b32.cont [2/16] %v205, 128
    %210 = vxpose.xlu0.b32.cont [3/16] %v206, 128
    %211 = vxpose.xlu0.b32.cont [4/16] %v207, 128
    %212 = vxpose.xlu0.b32.cont [5/16] 0.0, 128
    %213 = vxpose.xlu0.b32.cont [6/16] 0.0, 128
    %214 = vxpose.xlu0.b32.cont [7/16] 0.0, 128
    %215 = vxpose.xlu0.b32.cont [8/16] 0.0, 128
    %216 = vxpose.xlu0.b32.cont [9/16] 0.0, 128
    %217 = vxpose.xlu0.b32.cont [10/16] 0.0, 128
    %218 = vxpose.xlu0.b32.cont [11/16] 0.0, 128
    %219 = vxpose.xlu0.b32.cont [12/16] 0.0, 128
    %220 = vxpose.xlu0.b32.cont [13/16] 0.0, 128
    %221 = vxpose.xlu0.b32.cont [14/16] 0.0, 128
    %222 = vxpose.xlu0.b32.cont [15/16] 0.0, 128
    %223 = vxpose.xlu0.b32.end [16/16] 0.0, 128
    %v224 = vpop.trf.xlu0
    %v225 = vpop.trf.xlu0
    %v226 = vpop.trf.xlu0
    %v227 = vpop.trf.xlu0
    %v228 = vpop.trf.xlu0
    %v229 = vpop.trf.xlu0
    %v230 = vpop.trf.xlu0
    %v231 = vpop.trf.xlu0
    %v232 = vpop.trf.xlu0
    %v233 = vpop.trf.xlu0
    %v234 = vpop.trf.xlu0
    %v235 = vpop.trf.xlu0
    %v236 = vpop.trf.xlu0
    %v237 = vpop.trf.xlu0
    %v238 = vpop.trf.xlu0
    %v239 = vpop.trf.xlu0
    %s240 = scalar_lea.vmem [#allocation2], 8
    %241 = vst.msk [vmem:[%s240] sm:$0xff] %vm151, %v224
    // Predicated region
    $region14: #{tpu_custom_call.1} parent=1 // pred_check
      _
    $region15: #{tpu_custom_call.1} parent=1 // pred_check_branch
      %243 = sbr.rel (0) target = $region17
    $region16: #{tpu_custom_call.1} parent=1 // pred_region
      %s245 = ssub.s32 256, 256
      %246 = vsyncadd [#allocation3], %s245
      %s247 = sshll.u32 [#allocation2], 4
      %s248 = int_to_ptr.vmem [resolvable:$true] %s247
      %253 = dma.vmem_to_hbm [thread:$0]  %s248, 256, %s3, [#allocation3], 128, 128, 8
    $region17: #{tpu_custom_call.1} parent=1 // pred_fallthru
      _
    // Predicated region
    $region18: #{tpu_custom_call.1} parent=1 // pred_check
      _
    $region19: #{tpu_custom_call.1} parent=1 // pred_check_branch
      %255 = sbr.rel (0) target = $region21
    $region20: #{tpu_custom_call.1} parent=1 // pred_region
      %256 = dma.done [#allocation3], 256
    $region21: #{tpu_custom_call.1} parent=1 // pred_fallthru
      _
    %257 = vsyncpa [#allocation3], 1

</llo_original>
